<compile_context>
chip_gen: v5e
topology: v5e:2x2
jax: 0.10.0
libtpu: 0.0.40
codegen_flags: <defaults>
</compile_context>

<pallas_src>
import jax
import jax.numpy as jnp
from jax.experimental import pallas as pl
from jax.experimental.pallas import tpu as pltpu

EMB_DIM = 128       # embedding_net output dim (fc1 expects 128)
HID_DIM = 64        # fc1 output dim
N_CLASSES = 6       # fc2 output dim (hardcoded 6 in the PyTorch module)
PAD_OUT = 8         # padded logits width (full last dim of the output array)
NEG_INF = -1e30     # padded-class bias -> softmax weight exactly 0

VMEM_LIMIT_BYTES = 48 * 1024 * 1024   # explicit scoped-VMEM limit (all chips)
VMEM_DATA_BUDGET = 40 * 1024 * 1024   # tiles + weights sized under this


def _round_up(n, m):
    return ((n + m - 1) // m) * m


def _cdiv(a, b):
    return -(-a // b)


def _prelu(x, alpha):
    # nn.PReLU() with a single shared scalar parameter (default init 0.25).
    return jnp.where(x >= 0.0, x, alpha * x)


def _weight_bytes(d_in):
    # All resident f32 weights/biases + the SMEM alpha scalar.
    return 4 * (d_in * EMB_DIM + EMB_DIM
                + EMB_DIM * HID_DIM + HID_DIM
                + HID_DIM * PAD_OUT + PAD_OUT
                + 1)


def _choose_tile(B, d_in, tile_b):
    """Pick a batch tile: VMEM-budgeted, balanced, >=2 grid steps when B > 8."""
    # Per-row VMEM cost: double-buffered x & out streams + transient activations.
    per_row = 4 * (2 * (d_in + PAD_OUT) + EMB_DIM + HID_DIM + PAD_OUT)
    avail = max(VMEM_DATA_BUDGET - _weight_bytes(d_in), per_row * 8)
    tb_cap = max(8, (avail // per_row) // 8 * 8)

    tb = max(8, min(tile_b, tb_cap, _round_up(B, 8)))

    # Balance tiles (padding < 8 rows) and guarantee >=2 steps for v7x megacore.
    ntiles = _cdiv(B, tb)
    if B > 8:
        ntiles = max(ntiles, 2)
    tb = max(8, min(tb, _round_up(_cdiv(B, ntiles), 8)))

    padded_b = _round_up(B, tb)
    return tb, padded_b


def classification_kernel(alpha_ref,            # SMEM (1,1) shared PReLU weight
                          x_ref,                # VMEM (TILE_B, D_in)
                          wemb_ref, bemb_ref,   # VMEM (D_in,128), (1,128)
                          w1_ref, b1_ref,       # VMEM (128,64),   (1,64)
                          w2p_ref, b2p_ref,     # VMEM (64,8),     (1,8) padded
                          out_ref):             # VMEM (TILE_B, 8)
    alpha = alpha_ref[0, 0]

    # embedding_net stand-in: Linear(D_in -> 128)
    emb = jnp.dot(x_ref[...], wemb_ref[...],
                  preferred_element_type=jnp.float32) + bemb_ref[...]

    # self.nonlinear (shared PReLU)
    h = _prelu(emb, alpha)

    # fc1: 128 -> 64
    h1 = jnp.dot(h, w1_ref[...],
                 preferred_element_type=jnp.float32) + b1_ref[...]

    # self.nonlinear (same shared PReLU parameter)
    h1 = _prelu(h1, alpha)

    # fc2: 64 -> 6, padded to 8 columns (padded bias = -1e30)
    logits = jnp.dot(h1, w2p_ref[...],
                     preferred_element_type=jnp.float32) + b2p_ref[...]

    # F.softmax(..., dim=-1), numerically stable; padded columns -> exp == 0.
    m = jnp.max(logits, axis=-1, keepdims=True)
    e = jnp.exp(logits - m)
    inv = 1.0 / jnp.sum(e, axis=-1, keepdims=True)   # tb divides, then bcast mul
    out_ref[...] = e * inv


def classification_net(x, params, *, tile_b=1024):
    """x: (B, D_in) float32 -> softmax scores (B, 6) float32."""
    B, d_in = x.shape
    alpha, wemb, bemb, w1, b1, w2, b2 = params

    # fc2 padded to PAD_OUT columns; padded bias columns effectively -inf.
    w2p = jnp.pad(w2, ((0, 0), (0, PAD_OUT - N_CLASSES)))
    b2p = jnp.pad(b2, ((0, 0), (0, PAD_OUT - N_CLASSES)),
                  constant_values=NEG_INF)

    tb, padded_b = _choose_tile(B, d_in, tile_b)
    if padded_b != B:
        x = jnp.pad(x, ((0, padded_b - B), (0, 0)))
    grid = (padded_b // tb,)

    vmem = pltpu.MemorySpace.VMEM
    smem = pltpu.MemorySpace.SMEM

    in_specs = [
        # shared PReLU scalar, stays in SMEM every grid step
        pl.BlockSpec((1, 1), lambda i: (0, 0), memory_space=smem),
        # x: tiled over batch
        pl.BlockSpec((tb, d_in), lambda i: (i, 0), memory_space=vmem),
        # weights / biases: same block every step -> resident in VMEM
        pl.BlockSpec((d_in, EMB_DIM), lambda i: (0, 0), memory_space=vmem),
        pl.BlockSpec((1, EMB_DIM), lambda i: (0, 0), memory_space=vmem),
        pl.BlockSpec((EMB_DIM, HID_DIM), lambda i: (0, 0), memory_space=vmem),
        pl.BlockSpec((1, HID_DIM), lambda i: (0, 0), memory_space=vmem),
        pl.BlockSpec((HID_DIM, PAD_OUT), lambda i: (0, 0), memory_space=vmem),
        pl.BlockSpec((1, PAD_OUT), lambda i: (0, 0), memory_space=vmem),
    ]
    out_spec = pl.BlockSpec((tb, PAD_OUT), lambda i: (i, 0),
                            memory_space=vmem)

    flops = 2 * padded_b * (d_in * EMB_DIM + EMB_DIM * HID_DIM
                            + HID_DIM * PAD_OUT)
    transcendentals = padded_b * PAD_OUT  # exp in softmax
    bytes_accessed = (4 * padded_b * d_in            # x read
                      + 4 * padded_b * PAD_OUT       # narrow output write
                      + _weight_bytes(d_in))         # weights, biases, alpha

    out = pl.pallas_call(
        classification_kernel,
        out_shape=jax.ShapeDtypeStruct((padded_b, PAD_OUT), jnp.float32),
        grid=grid,
        in_specs=in_specs,
        out_specs=out_spec,
        compiler_params=pltpu.CompilerParams(
            dimension_semantics=("parallel",),
            vmem_limit_bytes=VMEM_LIMIT_BYTES),
        cost_estimate=pl.CostEstimate(
            flops=flops,
            transcendentals=transcendentals,
            bytes_accessed=bytes_accessed),
    )(alpha, x, wemb, bemb, w1, b1, w2p, b2p)

    # Strip batch padding and the 2 padded class columns (trivial slice).
    return out[:B, :N_CLASSES]


def init_params(key, d_in):
    """Deterministic synthetic parameters (shapes follow the module __init__)."""
    k = jax.random.split(key, 6)
    # embedding_net stand-in: Linear(d_in, 128)
    wemb = jax.random.normal(k[0], (d_in, EMB_DIM), jnp.float32) * (1.0 / jnp.sqrt(d_in))
    bemb = jax.random.normal(k[1], (1, EMB_DIM), jnp.float32) * 0.01
    # fc1: Linear(128, 64)
    w1 = jax.random.normal(k[2], (EMB_DIM, HID_DIM), jnp.float32) * (1.0 / jnp.sqrt(EMB_DIM))
    b1 = jax.random.normal(k[3], (1, HID_DIM), jnp.float32) * 0.01
    # fc2: Linear(64, 6)
    w2 = jax.random.normal(k[4], (HID_DIM, N_CLASSES), jnp.float32) * (1.0 / jnp.sqrt(HID_DIM))
    b2 = jax.random.normal(k[5], (1, N_CLASSES), jnp.float32) * 0.01
    # nn.PReLU(): single shared parameter, default 0.25, stored as (1,1) for SMEM
    alpha = jnp.full((1, 1), 0.25, jnp.float32)
    return alpha, wemb, bemb, w1, b1, w2, b2


def reference_forward(x, params):
    """Pure-JAX reference of the same forward pass, for correctness check."""
    alpha, wemb, bemb, w1, b1, w2, b2 = params
    a = alpha[0, 0]
    emb = x @ wemb + bemb
    h = jnp.maximum(emb, 0) + a * jnp.minimum(emb, 0)
    h1 = h @ w1 + b1
    h1 = jnp.maximum(h1, 0) + a * jnp.minimum(h1, 0)
    logits = h1 @ w2 + b2
    return jax.nn.softmax(logits, axis=-1)


if __name__ == "__main__":
    key = jax.random.PRNGKey(0)
    kx, kp = jax.random.split(key)

    B, D_IN = 8, 256  # small batch, flattened feature vector into embedding_net
    x = jax.random.normal(kx, (B, D_IN), jnp.float32)
    params = init_params(kp, D_IN)

    scores = classification_net(x, params)
    scores = jax.block_until_ready(scores)

    ref = reference_forward(x, params)
    assert scores.shape == (B, N_CLASSES)
    assert jnp.allclose(jnp.sum(scores, axis=-1), 1.0, atol=1e-5)
    assert jnp.allclose(scores, ref, atol=1e-5, rtol=1e-5)

    # Batch that is not a multiple of the tile (padding + multi-step grid path).
    B2 = 37
    x2 = jax.random.normal(jax.random.PRNGKey(1), (B2, D_IN), jnp.float32)
    s2 = jax.block_until_ready(classification_net(x2, params, tile_b=16))
    assert s2.shape == (B2, N_CLASSES)
    assert jnp.allclose(s2, reference_forward(x2, params), atol=1e-5, rtol=1e-5)

    print("KERNEL_OK")
</pallas_src>

<mosaic_0001>
module attributes {stable_mosaic.version = 11 : i64} {
  func.func @classification_kernel(%arg0: i32, %arg1: memref<1x1xf32, #tpu.memory_space<smem>>, %arg2: memref<8x256xf32, #tpu.memory_space<vmem>>, %arg3: memref<256x128xf32, #tpu.memory_space<vmem>>, %arg4: memref<1x128xf32, #tpu.memory_space<vmem>>, %arg5: memref<128x64xf32, #tpu.memory_space<vmem>>, %arg6: memref<1x64xf32, #tpu.memory_space<vmem>>, %arg7: memref<64x8xf32, #tpu.memory_space<vmem>>, %arg8: memref<1x8xf32, #tpu.memory_space<vmem>>, %arg9: memref<8x8xf32, #tpu.memory_space<vmem>>) attributes {dimension_semantics = [#tpu.dimension_semantics<parallel>], iteration_bounds = array<i64: 1>, scalar_prefetch = 0 : i64, scratch_operands = 0 : i64, tpu.core_type = #tpu.core_type<tc>, window_params = [{transform_indices = @transform_0, window_bounds = array<i64: 1, 1>}, {transform_indices = @transform_1, window_bounds = array<i64: 8, 256>}, {pipeline_mode = #tpu.pipeline_mode<synchronous>, transform_indices = @transform_2, window_bounds = array<i64: 256, 128>}, {pipeline_mode = #tpu.pipeline_mode<synchronous>, transform_indices = @transform_3, window_bounds = array<i64: 1, 128>}, {pipeline_mode = #tpu.pipeline_mode<synchronous>, transform_indices = @transform_4, window_bounds = array<i64: 128, 64>}, {pipeline_mode = #tpu.pipeline_mode<synchronous>, transform_indices = @transform_5, window_bounds = array<i64: 1, 64>}, {pipeline_mode = #tpu.pipeline_mode<synchronous>, transform_indices = @transform_6, window_bounds = array<i64: 64, 8>}, {pipeline_mode = #tpu.pipeline_mode<synchronous>, transform_indices = @transform_7, window_bounds = array<i64: 1, 8>}, {transform_indices = @transform_8, window_bounds = array<i64: 8, 8>}]} {
    %c0 = arith.constant 0 : index
    %c0_0 = arith.constant 0 : index
    %0 = memref.load %arg1[%c0, %c0_0] : memref<1x1xf32, #tpu.memory_space<smem>>
    %c0_1 = arith.constant 0 : index
    %c0_2 = arith.constant 0 : index
    %1 = vector.load %arg2[%c0_1, %c0_2] : memref<8x256xf32, #tpu.memory_space<vmem>>, vector<8x256xf32>
    %c0_3 = arith.constant 0 : index
    %c0_4 = arith.constant 0 : index
    %2 = vector.load %arg3[%c0_3, %c0_4] : memref<256x128xf32, #tpu.memory_space<vmem>>, vector<256x128xf32>
    %cst = arith.constant dense<0.000000e+00> : vector<8x128xf32>
    %3 = tpu.matmul %1, %2, %cst {dimension_numbers = #tpu.dot_dimension_numbers<[1], [0], [0], [1], [0, 0, 1, 1], [], []>} : vector<8x256xf32>, vector<256x128xf32>, vector<8x128xf32> -> vector<8x128xf32>
    %c0_5 = arith.constant 0 : index
    %c0_6 = arith.constant 0 : index
    %4 = vector.load %arg4[%c0_5, %c0_6] : memref<1x128xf32, #tpu.memory_space<vmem>>, vector<1x128xf32>
    %5 = vector.broadcast %4 : vector<1x128xf32> to vector<8x128xf32>
    %6 = arith.addf %3, %5 : vector<8x128xf32>
    %cst_7 = arith.constant 0.000000e+00 : f32
    %7 = vector.broadcast %cst_7 : f32 to vector<8x128xf32>
    %8 = arith.cmpf oge, %6, %7 : vector<8x128xf32>
    %9 = vector.broadcast %0 : f32 to vector<8x128xf32>
    %10 = arith.mulf %9, %6 : vector<8x128xf32>
    %11 = arith.select %8, %6, %10 : vector<8x128xi1>, vector<8x128xf32>
    %c0_8 = arith.constant 0 : index
    %c0_9 = arith.constant 0 : index
    %12 = vector.load %arg5[%c0_8, %c0_9] : memref<128x64xf32, #tpu.memory_space<vmem>>, vector<128x64xf32>
    %cst_10 = arith.constant dense<0.000000e+00> : vector<8x64xf32>
    %13 = tpu.matmul %11, %12, %cst_10 {dimension_numbers = #tpu.dot_dimension_numbers<[1], [0], [0], [1], [0, 0, 1, 1], [], []>} : vector<8x128xf32>, vector<128x64xf32>, vector<8x64xf32> -> vector<8x64xf32>
    %c0_11 = arith.constant 0 : index
    %c0_12 = arith.constant 0 : index
    %14 = vector.load %arg6[%c0_11, %c0_12] : memref<1x64xf32, #tpu.memory_space<vmem>>, vector<1x64xf32>
    %15 = vector.broadcast %14 : vector<1x64xf32> to vector<8x64xf32>
    %16 = arith.addf %13, %15 : vector<8x64xf32>
    %cst_13 = arith.constant 0.000000e+00 : f32
    %17 = vector.broadcast %cst_13 : f32 to vector<8x64xf32>
    %18 = arith.cmpf oge, %16, %17 : vector<8x64xf32>
    %19 = vector.broadcast %0 : f32 to vector<8x64xf32>
    %20 = arith.mulf %19, %16 : vector<8x64xf32>
    %21 = arith.select %18, %16, %20 : vector<8x64xi1>, vector<8x64xf32>
    %c0_14 = arith.constant 0 : index
    %c0_15 = arith.constant 0 : index
    %22 = vector.load %arg7[%c0_14, %c0_15] : memref<64x8xf32, #tpu.memory_space<vmem>>, vector<64x8xf32>
    %cst_16 = arith.constant dense<0.000000e+00> : vector<8x8xf32>
    %23 = tpu.matmul %21, %22, %cst_16 {dimension_numbers = #tpu.dot_dimension_numbers<[1], [0], [0], [1], [0, 0, 1, 1], [], []>} : vector<8x64xf32>, vector<64x8xf32>, vector<8x8xf32> -> vector<8x8xf32>
    %c0_17 = arith.constant 0 : index
    %c0_18 = arith.constant 0 : index
    %24 = vector.load %arg8[%c0_17, %c0_18] : memref<1x8xf32, #tpu.memory_space<vmem>>, vector<1x8xf32>
    %25 = vector.broadcast %24 : vector<1x8xf32> to vector<8x8xf32>
    %26 = arith.addf %23, %25 : vector<8x8xf32>
    %cst_19 = arith.constant dense<0xFF800000> : vector<8xf32>
    %27 = vector.multi_reduction <maximumf>, %26, %cst_19 [1] : vector<8x8xf32> to vector<8xf32>
    %28 = vector.shape_cast %27 : vector<8xf32> to vector<8x1xf32>
    %29 = vector.broadcast %28 : vector<8x1xf32> to vector<8x8xf32>
    %30 = arith.subf %26, %29 : vector<8x8xf32>
    %31 = math.exp %30 : vector<8x8xf32>
    %cst_20 = arith.constant dense<0.000000e+00> : vector<8xf32>
    %32 = vector.multi_reduction <add>, %31, %cst_20 [1] : vector<8x8xf32> to vector<8xf32>
    %33 = vector.shape_cast %32 : vector<8xf32> to vector<8x1xf32>
    %cst_21 = arith.constant 1.000000e+00 : f32
    %34 = vector.broadcast %cst_21 : f32 to vector<8x1xf32>
    %35 = arith.divf %34, %33 : vector<8x1xf32>
    %36 = vector.broadcast %35 : vector<8x1xf32> to vector<8x8xf32>
    %37 = arith.mulf %31, %36 : vector<8x8xf32>
    %c0_22 = arith.constant 0 : index
    %c0_23 = arith.constant 0 : index
    %38 = vector.load %arg9[%c0_22, %c0_23] : memref<8x8xf32, #tpu.memory_space<vmem>>, vector<8x8xf32>
    tpu.vector_store %arg9[%c0_22, %c0_23], %37 {strides = array<i32>} : memref<8x8xf32, #tpu.memory_space<vmem>>, vector<8x8xf32>,
    return
  }
  func.func @transform_0(%arg0: i32) -> (i32, i32) {
    %c0_i32 = arith.constant 0 : i32
    %c0_i32_0 = arith.constant 0 : i32
    %c0_i32_1 = arith.constant 0 : i32
    return %c0_i32, %c0_i32_0 : i32, i32
  }
  func.func @transform_1(%arg0: i32) -> (i32, i32) {
    %c0_i32 = arith.constant 0 : i32
    %c0_i32_0 = arith.constant 0 : i32
    return %arg0, %c0_i32 : i32, i32
  }
  func.func @transform_2(%arg0: i32) -> (i32, i32) {
    %c0_i32 = arith.constant 0 : i32
    %c0_i32_0 = arith.constant 0 : i32
    %c0_i32_1 = arith.constant 0 : i32
    return %c0_i32, %c0_i32_0 : i32, i32
  }
  func.func @transform_3(%arg0: i32) -> (i32, i32) {
    %c0_i32 = arith.constant 0 : i32
    %c0_i32_0 = arith.constant 0 : i32
    %c0_i32_1 = arith.constant 0 : i32
    return %c0_i32, %c0_i32_0 : i32, i32
  }
  func.func @transform_4(%arg0: i32) -> (i32, i32) {
    %c0_i32 = arith.constant 0 : i32
    %c0_i32_0 = arith.constant 0 : i32
    %c0_i32_1 = arith.constant 0 : i32
    return %c0_i32, %c0_i32_0 : i32, i32
  }
  func.func @transform_5(%arg0: i32) -> (i32, i32) {
    %c0_i32 = arith.constant 0 : i32
    %c0_i32_0 = arith.constant 0 : i32
    %c0_i32_1 = arith.constant 0 : i32
    return %c0_i32, %c0_i32_0 : i32, i32
  }
  func.func @transform_6(%arg0: i32) -> (i32, i32) {
    %c0_i32 = arith.constant 0 : i32
    %c0_i32_0 = arith.constant 0 : i32
    %c0_i32_1 = arith.constant 0 : i32
    return %c0_i32, %c0_i32_0 : i32, i32
  }
  func.func @transform_7(%arg0: i32) -> (i32, i32) {
    %c0_i32 = arith.constant 0 : i32
    %c0_i32_0 = arith.constant 0 : i32
    %c0_i32_1 = arith.constant 0 : i32
    return %c0_i32, %c0_i32_0 : i32, i32
  }
  func.func @transform_8(%arg0: i32) -> (i32, i32) {
    %c0_i32 = arith.constant 0 : i32
    %c0_i32_0 = arith.constant 0 : i32
    return %arg0, %c0_i32 : i32, i32
  }
}

</mosaic_0001>

<llo_original>
// kernel: tpu_custom_call.1
$region0: #{tpu_custom_call.1}
  #allocation0 [shape = 'u32[]', space=smem, size = 0x4, offset = 0x4, fixed_abs, tag = 'smem constant byte address 0x4 - core index']
  #allocation1 [shape = 'u32[72,128]{1,0:T(1,128)}', space=vmem, size = 0x9000, scoped, tag = 'internal scratch']
  #allocation2 [shape = 'f32[1,1]{1,0:T(1,128)S(6)}', space=smem, size = 0x200, scoped, tag = 'scoped memory for tpu_custom_call.1']
  %s0 = inlined_call_operand.<no memory space> [shape: f32[1,1], index: 0, kind: input, shape index: {}]
  %s1 = inlined_call_operand.hbm [shape: f32[8,256], index: 1, kind: input, shape index: {}]
  %s2 = inlined_call_operand.vmem [shape: f32[256,128], index: 2, kind: input, shape index: {}]
  %s3 = inlined_call_operand.vmem [shape: f32[1,128], index: 3, kind: input, shape index: {}]
  %s4 = inlined_call_operand.vmem [shape: f32[128,64], index: 4, kind: input, shape index: {}]
  %s5 = inlined_call_operand.vmem [shape: f32[1,64], index: 5, kind: input, shape index: {}]
  %s6 = inlined_call_operand.vmem [shape: f32[64,8], index: 6, kind: input, shape index: {}]
  %s7 = inlined_call_operand.vmem [shape: f32[1,8], index: 7, kind: input, shape index: {}]
  %s8 = inlined_call_operand.hbm [shape: f32[8,8], index: 8, kind: output, shape index: {}]
  %s9 = sld [smem:[#allocation0]]
  $region46: #{tpu_custom_call.1} parent=0
    _
  %s11 = ssub.s32 1, %s9
  %s12 = scalar_select 0, %s11, %s9
  %13 = sst [smem:[#allocation2]] %s0
  $region1: #{tpu_custom_call.1} parent=0
    #allocation3 [shape = 'u8[8192]{0}', space=vmem, size = 0x2000, scoped, tag = 'input window, operand 1, single buffered']
    #allocation4 [shape = 's32[1]{0}', space=sflag, size = 0x4, scoped, tag = 'scoped memory for tpu_custom_call.1']
    #allocation5 [shape = 's32[1]{0}', space=sflag, size = 0x4, scoped, tag = 'scoped memory for tpu_custom_call.1']
    #allocation6 [shape = 'u8[4096]{0}', space=vmem, size = 0x1000, scoped, tag = 'output window, operand 0, single buffered']
    %14 = vsyncpa [#allocation4], 0
    %15 = vsyncpa [#allocation5], 0
    // Predicated region
    $region2: #{tpu_custom_call.1} parent=1 // pred_check
      _
    $region3: #{tpu_custom_call.1} parent=1 // pred_check_branch
      %17 = sbr.rel (0) target = $region5
    $region4: #{tpu_custom_call.1} parent=1 // pred_region
      _
    $region5: #{tpu_custom_call.1} parent=1 // pred_fallthru
      _
    // Predicated region
    $region6: #{tpu_custom_call.1} parent=1 // pred_check
      _
    $region7: #{tpu_custom_call.1} parent=1 // pred_check_branch
      %19 = sbr.rel (0) target = $region9
    $region8: #{tpu_custom_call.1} parent=1 // pred_region
      %21 = vsyncadd [#allocation4], 0
      %s23 = sshll.u32 %s1, 4
      %s24 = int_to_ptr.hbm [resolvable:$true] %s23
      %s25 = sshll.u32 [#allocation3], 4
      %s26 = int_to_ptr.vmem [resolvable:$true] %s25
      %28 = dma.hbm_to_vmem [thread:$0]  %s24, 256, %s26, [#allocation4]
    $region9: #{tpu_custom_call.1} parent=1 // pred_fallthru
      _
    // Predicated region
    $region10: #{tpu_custom_call.1} parent=1 // pred_check
      _
    $region11: #{tpu_custom_call.1} parent=1 // pred_check_branch
      %30 = sbr.rel (0) target = $region13
    $region12: #{tpu_custom_call.1} parent=1 // pred_region
      _
    $region13: #{tpu_custom_call.1} parent=1 // pred_fallthru
      _
    // Predicated region
    $region14: #{tpu_custom_call.1} parent=1 // pred_check
      _
    $region15: #{tpu_custom_call.1} parent=1 // pred_check_branch
      %32 = sbr.rel (0) target = $region17
    $region16: #{tpu_custom_call.1} parent=1 // pred_region
      _
    $region17: #{tpu_custom_call.1} parent=1 // pred_fallthru
      _
    // Predicated region
    $region18: #{tpu_custom_call.1} parent=1 // pred_check
      _
    $region19: #{tpu_custom_call.1} parent=1 // pred_check_branch
      %34 = sbr.rel (0) target = $region21
    $region20: #{tpu_custom_call.1} parent=1 // pred_region
      _
    $region21: #{tpu_custom_call.1} parent=1 // pred_fallthru
      _
    // Predicated region
    $region22: #{tpu_custom_call.1} parent=1 // pred_check
      _
    $region23: #{tpu_custom_call.1} parent=1 // pred_check_branch
      %36 = sbr.rel (0) target = $region25
    $region24: #{tpu_custom_call.1} parent=1 // pred_region
      _
    $region25: #{tpu_custom_call.1} parent=1 // pred_fallthru
      _
    // Predicated region
    $region26: #{tpu_custom_call.1} parent=1 // pred_check
      _
    $region27: #{tpu_custom_call.1} parent=1 // pred_check_branch
      %38 = sbr.rel (0) target = $region29
    $region28: #{tpu_custom_call.1} parent=1 // pred_region
      _
    $region29: #{tpu_custom_call.1} parent=1 // pred_fallthru
      _
    // Predicated region
    $region30: #{tpu_custom_call.1} parent=1 // pred_check
      _
    $region31: #{tpu_custom_call.1} parent=1 // pred_check_branch
      %40 = sbr.rel (0) target = $region33
    $region32: #{tpu_custom_call.1} parent=1 // pred_region
      _
    $region33: #{tpu_custom_call.1} parent=1 // pred_fallthru
      _
    // Predicated region
    $region34: #{tpu_custom_call.1} parent=1 // pred_check
      _
    $region35: #{tpu_custom_call.1} parent=1 // pred_check_branch
      %42 = sbr.rel (0) target = $region37
    $region36: #{tpu_custom_call.1} parent=1 // pred_region
      %44 = dma.done [#allocation4], 256
    $region37: #{tpu_custom_call.1} parent=1 // pred_fallthru
      _
    %s45 = sld [smem:[#allocation2]]
    %v46 = vld [vmem:[#allocation3] sm:$0xff]
    %v47 = vld [vmem:[#allocation3 + $0x8] sm:$0xff]
    %v48 = vld [vmem:[%s2] sm:$0xff]
    %v49 = vld [vmem:[%s2 + $0x8] sm:$0xff]
    %v50 = vld [vmem:[%s2 + $0x10] sm:$0xff]
    %v51 = vld [vmem:[%s2 + $0x18] sm:$0xff]
    %v52 = vld [vmem:[%s2 + $0x20] sm:$0xff]
    %v53 = vld [vmem:[%s2 + $0x28] sm:$0xff]
    %v54 = vld [vmem:[%s2 + $0x30] sm:$0xff]
    %v55 = vld [vmem:[%s2 + $0x38] sm:$0xff]
    %v56 = vld [vmem:[%s2 + $0x40] sm:$0xff]
    %v57 = vld [vmem:[%s2 + $0x48] sm:$0xff]
    %v58 = vld [vmem:[%s2 + $0x50] sm:$0xff]
    %v59 = vld [vmem:[%s2 + $0x58] sm:$0xff]
    %v60 = vld [vmem:[%s2 + $0x60] sm:$0xff]
    %v61 = vld [vmem:[%s2 + $0x68] sm:$0xff]
    %v62 = vld [vmem:[%s2 + $0x70] sm:$0xff]
    %v63 = vld [vmem:[%s2 + $0x78] sm:$0xff]
    %v64 = vld [vmem:[%s2 + $0x80] sm:$0xff]
    %v65 = vld [vmem:[%s2 + $0x88] sm:$0xff]
    %v66 = vld [vmem:[%s2 + $0x90] sm:$0xff]
    %v67 = vld [vmem:[%s2 + $0x98] sm:$0xff]
    %v68 = vld [vmem:[%s2 + $0xa0] sm:$0xff]
    %v69 = vld [vmem:[%s2 + $0xa8] sm:$0xff]
    %v70 = vld [vmem:[%s2 + $0xb0] sm:$0xff]
    %v71 = vld [vmem:[%s2 + $0xb8] sm:$0xff]
    %v72 = vld [vmem:[%s2 + $0xc0] sm:$0xff]
    %v73 = vld [vmem:[%s2 + $0xc8] sm:$0xff]
    %v74 = vld [vmem:[%s2 + $0xd0] sm:$0xff]
    %v75 = vld [vmem:[%s2 + $0xd8] sm:$0xff]
    %v76 = vld [vmem:[%s2 + $0xe0] sm:$0xff]
    %v77 = vld [vmem:[%s2 + $0xe8] sm:$0xff]
    %v78 = vld [vmem:[%s2 + $0xf0] sm:$0xff]
    %v79 = vld [vmem:[%s2 + $0xf8] sm:$0xff]
    %v80 = vld [vmem:[%s3] sm:$0x1]
    %v82 = vperm.slane %v80, 0
    %84 = vmatpush.msra.mxu0 %v63
    %85 = vmatpush.msra.mxu0 %v62
    %86 = vmatpush.msra.mxu0 %v61
    %87 = vmatpush.msra.mxu0 %v60
    %88 = vmatpush.msra.mxu0 %v59
    %89 = vmatpush.msra.mxu0 %v58
    %90 = vmatpush.msra.mxu0 %v57
    %91 = vmatpush.msra.mxu0 %v56
    %92 = vmatpush.msra.mxu0 %v55
    %93 = vmatpush.msra.mxu0 %v54
    %94 = vmatpush.msra.mxu0 %v53
    %95 = vmatpush.msra.mxu0 %v52
    %96 = vmatpush.msra.mxu0 %v51
    %97 = vmatpush.msra.mxu0 %v50
    %98 = vmatpush.msra.mxu0 %v49
    %99 = vmatpush.msra.mxu0 %v48
    %100 = vmatmul.f32.gmra.mxu0 %v46
    %v101 = vpop.f32.mrf.mxu0
    %v102 = vadd.f32 %v82, %v101
    %103 = vdwg.mxu0
    %104 = vmatpush.msra.mxu0 %v79
    %105 = vmatpush.msra.mxu0 %v78
    %106 = vmatpush.msra.mxu0 %v77
    %107 = vmatpush.msra.mxu0 %v76
    %108 = vmatpush.msra.mxu0 %v75
    %109 = vmatpush.msra.mxu0 %v74
    %110 = vmatpush.msra.mxu0 %v73
    %111 = vmatpush.msra.mxu0 %v72
    %112 = vmatpush.msra.mxu0 %v71
    %113 = vmatpush.msra.mxu0 %v70
    %114 = vmatpush.msra.mxu0 %v69
    %115 = vmatpush.msra.mxu0 %v68
    %116 = vmatpush.msra.mxu0 %v67
    %117 = vmatpush.msra.mxu0 %v66
    %118 = vmatpush.msra.mxu0 %v65
    %119 = vmatpush.msra.mxu0 %v64
    %120 = vmatmul.f32.gmra.mxu0 %v47
    %v121 = vpop.f32.mrf.mxu0
    %v122 = vadd.f32 %v102, %v121
    %123 = vdwg.mxu0
    %vm124 = vcmp.ge.f32.partialorder %v122, 0.0
    %v125 = vstv %s45
    %v126 = vmul.f32 %v125, %v122
    %v127 = vsel %vm124, %v122, %v126
    %v128 = vld [vmem:[%s4] sm:$0xff]
    %v129 = vld [vmem:[%s4 + $0x8] sm:$0xff]
    %v130 = vld [vmem:[%s4 + $0x10] sm:$0xff]
    %v131 = vld [vmem:[%s4 + $0x18] sm:$0xff]
    %v132 = vld [vmem:[%s4 + $0x20] sm:$0xff]
    %v133 = vld [vmem:[%s4 + $0x28] sm:$0xff]
    %v134 = vld [vmem:[%s4 + $0x30] sm:$0xff]
    %v135 = vld [vmem:[%s4 + $0x38] sm:$0xff]
    %v136 = vld [vmem:[%s4 + $0x40] sm:$0xff]
    %v137 = vld [vmem:[%s4 + $0x48] sm:$0xff]
    %v138 = vld [vmem:[%s4 + $0x50] sm:$0xff]
    %v139 = vld [vmem:[%s4 + $0x58] sm:$0xff]
    %v140 = vld [vmem:[%s4 + $0x60] sm:$0xff]
    %v141 = vld [vmem:[%s4 + $0x68] sm:$0xff]
    %v142 = vld [vmem:[%s4 + $0x70] sm:$0xff]
    %v143 = vld [vmem:[%s4 + $0x78] sm:$0xff]
    %v144 = vld [vmem:[%s5] sm:$0x1]
    %v146 = vperm.slane %v144, 0
    %148 = vmatpush.msra.mxu0 %v143
    %149 = vmatpush.msra.mxu0 %v142
    %150 = vmatpush.msra.mxu0 %v141
    %151 = vmatpush.msra.mxu0 %v140
    %152 = vmatpush.msra.mxu0 %v139
    %153 = vmatpush.msra.mxu0 %v138
    %154 = vmatpush.msra.mxu0 %v137
    %155 = vmatpush.msra.mxu0 %v136
    %156 = vmatpush.msra.mxu0 %v135
    %157 = vmatpush.msra.mxu0 %v134
    %158 = vmatpush.msra.mxu0 %v133
    %159 = vmatpush.msra.mxu0 %v132
    %160 = vmatpush.msra.mxu0 %v131
    %161 = vmatpush.msra.mxu0 %v130
    %162 = vmatpush.msra.mxu0 %v129
    %163 = vmatpush.msra.mxu0 %v128
    %164 = vmatmul.f32.gmra.mxu0 %v127
    %v165 = vpop.f32.mrf.mxu0
    %v166 = vadd.f32 %v146, %v165
    %167 = vdwg.mxu0
    %vm168 = vcmp.ge.f32.partialorder %v166, 0.0
    %v169 = vmul.f32 %v125, %v166
    %v170 = vsel %vm168, %v166, %v169
    %v171 = vld [vmem:[%s6] sm:$0xff]
    %v172 = vld [vmem:[%s6 + $0x8] sm:$0xff]
    %v173 = vld [vmem:[%s6 + $0x10] sm:$0xff]
    %v174 = vld [vmem:[%s6 + $0x18] sm:$0xff]
    %v175 = vld [vmem:[%s6 + $0x20] sm:$0xff]
    %v176 = vld [vmem:[%s6 + $0x28] sm:$0xff]
    %v177 = vld [vmem:[%s6 + $0x30] sm:$0xff]
    %v178 = vld [vmem:[%s6 + $0x38] sm:$0xff]
    %v179 = vld [vmem:[%s7] sm:$0x1]
    %v181 = vperm.slane %v179, 0
    %vm183 = vcmask 523264
    %v185 = vsel %vm183, %v170, 0
    %187 = vmatpush.msra.mxu0 0.0
    %188 = vmatpush.msra.mxu0 0.0
    %189 = vmatpush.msra.mxu0 0.0
    %190 = vmatpush.msra.mxu0 0.0
    %191 = vmatpush.msra.mxu0 0.0
    %192 = vmatpush.msra.mxu0 0.0
    %193 = vmatpush.msra.mxu0 0.0
    %194 = vmatpush.msra.mxu0 0.0
    %195 = vmatpush.msra.mxu0 %v178
    %196 = vmatpush.msra.mxu0 %v177
    %197 = vmatpush.msra.mxu0 %v176
    %198 = vmatpush.msra.mxu0 %v175
    %199 = vmatpush.msra.mxu0 %v174
    %200 = vmatpush.msra.mxu0 %v173
    %201 = vmatpush.msra.mxu0 %v172
    %202 = vmatpush.msra.mxu0 %v171
    %203 = vmatmul.f32.gmra.mxu0 %v185
    %v204 = vpop.f32.mrf.mxu0
    %v205 = vadd.f32 %v181, %v204
    %206 = vdwg.mxu0
    %vm207 = vcmask 64512
    %v208 = vsel %vm207, %v205, -inf
    %209 = vmax.xlane.f32.xlu0 %v208
    %v210 = vpop.xlane.xlu0 %209
    %v211 = vsub.f32 %v205, %v210
    %v212 = vmul.f32 %v211, 1.442695
    %v213 = vpow.pop %v212
    %v214 = vsel %vm207, %v213, 0.0
    %215 = vadd.xlane.f32.xlu0 %v214
    %v216 = vpop.xlane.xlu0 %215
    %v217 = vrcp.pop %v216
    %v218 = vmul.f32 %v216, %v217
    %v219 = vsub.f32 1.0, %v218
    %v220 = vmul.f32 %v217, %v219
    %v221 = vadd.f32 %v217, %v220
    %vm222 = vweird.f32 %v216
    %vm223 = vweird.f32 %v217
    %vm224 = vmor %vm222, %vm223
    %v225 = vsel %vm224, %v217, %v221
    %v226 = vand.u32 2147483647, %v216
    %vm227 = vcmp.eq.f32.partialorder %v226, 8.507059e+37
    %v228 = vand.u32 %v216, 2147483648
    %v229 = vor.u32 1.1754944e-38, %v228
    %v230 = vsel %vm227, %v229, %v225
    %v231 = vmul.f32 1.0, %v230
    %v232 = vmul.f32 %v213, %v231
    %233 = vst.msk [vmem:[#allocation6] sm:$0xff] %vm207, %v232
    // Predicated region
    $region38: #{tpu_custom_call.1} parent=1 // pred_check
      _
    $region39: #{tpu_custom_call.1} parent=1 // pred_check_branch
      %235 = sbr.rel (0) target = $region41
    $region40: #{tpu_custom_call.1} parent=1 // pred_region
      %237 = vsyncadd [#allocation5], 0
      %s239 = sshll.u32 [#allocation6], 4
      %s240 = int_to_ptr.vmem [resolvable:$true] %s239
      %s241 = sshll.u32 %s8, 4
      %s242 = int_to_ptr.hbm [resolvable:$true] %s241
      %244 = dma.vmem_to_hbm [thread:$0]  %s240, 128, %s242, [#allocation5]
    $region41: #{tpu_custom_call.1} parent=1 // pred_fallthru
      _
    // Predicated region
    $region42: #{tpu_custom_call.1} parent=1 // pred_check
      _
    $region43: #{tpu_custom_call.1} parent=1 // pred_check_branch
      %246 = sbr.rel (0) target = $region45
    $region44: #{tpu_custom_call.1} parent=1 // pred_region
      %248 = dma.done [#allocation5], 128
    $region45: #{tpu_custom_call.1} parent=1 // pred_fallthru
      _
    %249 = vsyncpa [#allocation4], 1
    %250 = vsyncpa [#allocation5], 1

</llo_original>
